<compile_context>
chip_gen: v6e
topology: v6e:2x2x1
jax: 0.10.0
libtpu: 0.0.40
codegen_flags: <defaults>
</compile_context>

<pallas_src>
import functools
import math

import jax
import jax.numpy as jnp
from jax.experimental import pallas as pl
from jax.experimental.pallas import tpu as pltpu


def chebynet_kernel(*refs, Bt, N, K, Fin):
    """One batch tile per grid step.

    refs (K > 1):  x_ref (Bt*N, Fin) bf16, L_ref (N, N) bf16,
                   w_ref (K*Fin, Fout_pad) bf16, o_ref (Bt*N, Fout_pad) f32
    refs (K == 1): x_ref, w_ref, o_ref  (no adjacency input at all)
    """
    if K > 1:
        x_ref, L_ref, w_ref, o_ref = refs
        Lm = L_ref[...]                       # (N, N) bf16, loaded once
    else:
        x_ref, w_ref, o_ref = refs
        Lm = None

    # Build the Chebyshev stage entirely in vregs (no scratch round trip).
    stages = []
    for b in range(Bt):
        xb = x_ref[b * N:(b + 1) * N, :]      # (N, Fin) bf16, static slice
        parts = [xb]                          # order 0 (identity support): no matmul
        y = xb
        for _ in range(1, K):
            # (N, N) @ (N, Fin) on the MXU with f32 accumulation, then one
            # cheap bf16 round per order for the next recurrence step.
            y = jnp.dot(Lm, y, preferred_element_type=jnp.float32).astype(jnp.bfloat16)
            parts.append(y)
        stages.append(jnp.concatenate(parts, axis=-1) if K > 1 else xb)  # (N, K*Fin)

    # Batch-folded wide contraction: (Bt*N, K*Fin) @ (K*Fin, Fout_pad).
    s = jnp.concatenate(stages, axis=0) if Bt > 1 else stages[0]
    out = jnp.dot(s, w_ref[...], preferred_element_type=jnp.float32)
    o_ref[...] = jnp.maximum(out, 0.0).astype(o_ref.dtype)   # lane-dense full store


def generate_cheby_adj(L: jnp.ndarray, num_layers: int) -> jnp.ndarray:
    """Matches the PyTorch generate_cheby_adj: [I, L, L@L, ...] (f32, reference only)."""
    n = L.shape[1]
    support = []
    for i in range(num_layers):
        if i == 0:
            support.append(jnp.eye(n, dtype=L.dtype))
        elif i == 1:
            support.append(L)
        else:
            support.append(jnp.matmul(support[-1], L))
    return jnp.stack(support, axis=0)


def init_chebynet_params(key, in_channels, num_layers, out_channels):
    """Deterministic xavier_normal_ init for each GraphConvolution weight."""
    std = math.sqrt(2.0 / (in_channels + out_channels))  # gain = 1
    keys = jax.random.split(key, num_layers)
    weights = [
        std * jax.random.normal(k, (in_channels, out_channels), dtype=jnp.float32)
        for k in keys
    ]
    return jnp.stack(weights, axis=0)  # (K, Fin, Fout)


def chebynet_forward(x, L, weights, *, batch_tile=None):
    """x: (B, N, Fin), L: (N, N), weights: (K, Fin, Fout) -> (B, N, Fout) f32."""
    B, N, Fin = x.shape
    K, Fin_w, Fout = weights.shape
    assert Fin_w == Fin
    Bt = B if batch_tile is None else batch_tile          # default: one grid step
    assert B % Bt == 0, "batch must be divisible by batch_tile"
    assert Bt == B or (Bt * N) % 8 == 0, "batch-tile rows must be sublane aligned"

    Fout_pad = ((Fout + 127) // 128) * 128

    # bf16 MXU operands prepared once in the wrapper (halves x DMA bytes).
    x2d = x.reshape(B * N, Fin).astype(jnp.bfloat16)        # batch folded into rows
    w_cat = weights.reshape(K * Fin, Fout)                  # k-major concatenation
    w_cat = jnp.pad(w_cat, ((0, 0), (0, Fout_pad - Fout))).astype(jnp.bfloat16)

    in_specs = [pl.BlockSpec((Bt * N, Fin), lambda i: (i, 0))]
    args = [x2d]
    if K > 1:
        # Batch-invariant, constant index_map -> resident for the whole grid.
        in_specs.append(pl.BlockSpec((N, N), lambda i: (0, 0)))
        args.append(L.astype(jnp.bfloat16))
    in_specs.append(pl.BlockSpec((K * Fin, Fout_pad), lambda i: (0, 0)))
    args.append(w_cat)

    kernel = functools.partial(chebynet_kernel, Bt=Bt, N=N, K=K, Fin=Fin)

    # Advisory cost + an explicit VMEM budget (default scoped VMEM is 16-32 MiB).
    flops = 2 * (K - 1) * B * N * N * Fin + 2 * B * N * (K * Fin) * Fout_pad
    bytes_accessed = (B * N * Fin * 2 + (N * N * 2 if K > 1 else 0)
                      + K * Fin * Fout_pad * 2 + B * N * Fout_pad * 4)
    cost = pl.CostEstimate(flops=flops, transcendentals=0,
                           bytes_accessed=bytes_accessed)

    tile_bytes = Bt * N * Fin * 2 + Bt * N * Fout_pad * 4       # x tile + out tile
    resident_bytes = (N * N * 2 if K > 1 else 0) + K * Fin * Fout_pad * 2
    vmem_limit = int(min(112 << 20,
                         max(16 << 20, 4 * tile_bytes + 2 * resident_bytes + (2 << 20))))

    out = pl.pallas_call(
        kernel,
        out_shape=jax.ShapeDtypeStruct((B * N, Fout_pad), jnp.float32),
        grid_spec=pltpu.PrefetchScalarGridSpec(
            num_scalar_prefetch=0,
            grid=(B // Bt,),
            in_specs=in_specs,
            out_specs=pl.BlockSpec((Bt * N, Fout_pad), lambda i: (i, 0)),
        ),
        compiler_params=pltpu.CompilerParams(
            dimension_semantics=("parallel",),
            vmem_limit_bytes=vmem_limit,
        ),
        cost_estimate=cost,
    )(*args)

    # Un-fold the batch and strip the lane padding (pure XLA layout plumbing).
    return out.reshape(B, N, Fout_pad)[..., :Fout]


def chebynet_reference(x, L, weights):
    """Pure-JAX f32 reference mirroring the PyTorch forward."""
    K = weights.shape[0]
    adj = generate_cheby_adj(L, K)
    result = None
    for i in range(K):
        out = jnp.matmul(adj[i], x) @ weights[i]
        result = out if result is None else result + out
    return jax.nn.relu(result)


if __name__ == "__main__":
    # Small shapes consistent with the module's forward.
    B, N, Fin, Fout, K = 2, 16, 8, 32, 3

    key = jax.random.PRNGKey(0)
    kx, kl, kw = jax.random.split(key, 3)

    x = jax.random.normal(kx, (B, N, Fin), dtype=jnp.float32)
    L_raw = jax.random.normal(kl, (N, N), dtype=jnp.float32)
    L = 0.5 * (L_raw + L_raw.T) / N  # symmetric, normalized magnitude (bf16-safe powers)

    weights = init_chebynet_params(kw, Fin, K, Fout)

    out = chebynet_forward(x, L, weights)
    out = jax.block_until_ready(out)

    ref = chebynet_reference(x, L, weights)
    assert out.shape == (B, N, Fout)
    # bf16 MXU operands with f32 accumulation -> slightly looser tolerance.
    assert jnp.allclose(out, ref, atol=3e-2, rtol=3e-2), "mismatch vs reference"

    print("KERNEL_OK")
</pallas_src>

<mosaic_0001>
module attributes {stable_mosaic.version = 11 : i64} {
  func.func @chebynet_kernel(%arg0: i32, %arg1: memref<32x8xbf16, #tpu.memory_space<vmem>>, %arg2: memref<16x16xbf16, #tpu.memory_space<vmem>>, %arg3: memref<24x128xbf16, #tpu.memory_space<vmem>>, %arg4: memref<32x128xf32, #tpu.memory_space<vmem>>) attributes {dimension_semantics = [#tpu.dimension_semantics<parallel>], iteration_bounds = array<i64: 1>, scalar_prefetch = 0 : i64, scratch_operands = 0 : i64, tpu.core_type = #tpu.core_type<tc>, window_params = [{transform_indices = @transform_0, window_bounds = array<i64: 32, 8>}, {pipeline_mode = #tpu.pipeline_mode<synchronous>, transform_indices = @transform_1, window_bounds = array<i64: 16, 16>}, {pipeline_mode = #tpu.pipeline_mode<synchronous>, transform_indices = @transform_2, window_bounds = array<i64: 24, 128>}, {transform_indices = @transform_3, window_bounds = array<i64: 32, 128>}]} {
    %c0 = arith.constant 0 : index
    %c0_0 = arith.constant 0 : index
    %0 = vector.load %arg2[%c0, %c0_0] : memref<16x16xbf16, #tpu.memory_space<vmem>>, vector<16x16xbf16>
    %c0_1 = arith.constant 0 : index
    %c0_2 = arith.constant 0 : index
    %1 = vector.load %arg1[%c0_1, %c0_2] : memref<32x8xbf16, #tpu.memory_space<vmem>>, vector<16x8xbf16>
    %cst = arith.constant dense<0.000000e+00> : vector<16x8xf32>
    %2 = tpu.matmul %0, %1, %cst {dimension_numbers = #tpu.dot_dimension_numbers<[1], [0], [0], [1], [0, 0, 1, 1], [], []>} : vector<16x16xbf16>, vector<16x8xbf16>, vector<16x8xf32> -> vector<16x8xf32>
    %3 = arith.truncf %2 : vector<16x8xf32> to vector<16x8xbf16>
    %cst_3 = arith.constant dense<0.000000e+00> : vector<16x8xf32>
    %4 = tpu.matmul %0, %3, %cst_3 {dimension_numbers = #tpu.dot_dimension_numbers<[1], [0], [0], [1], [0, 0, 1, 1], [], []>} : vector<16x16xbf16>, vector<16x8xbf16>, vector<16x8xf32> -> vector<16x8xf32>
    %5 = arith.truncf %4 : vector<16x8xf32> to vector<16x8xbf16>
    %6 = tpu.concatenate %1, %3, %5 in 1 : vector<16x8xbf16>, vector<16x8xbf16>, vector<16x8xbf16> -> vector<16x24xbf16>
    %c16 = arith.constant 16 : index
    %c0_4 = arith.constant 0 : index
    %7 = vector.load %arg1[%c16, %c0_4] : memref<32x8xbf16, #tpu.memory_space<vmem>>, vector<16x8xbf16>
    %cst_5 = arith.constant dense<0.000000e+00> : vector<16x8xf32>
    %8 = tpu.matmul %0, %7, %cst_5 {dimension_numbers = #tpu.dot_dimension_numbers<[1], [0], [0], [1], [0, 0, 1, 1], [], []>} : vector<16x16xbf16>, vector<16x8xbf16>, vector<16x8xf32> -> vector<16x8xf32>
    %9 = arith.truncf %8 : vector<16x8xf32> to vector<16x8xbf16>
    %cst_6 = arith.constant dense<0.000000e+00> : vector<16x8xf32>
    %10 = tpu.matmul %0, %9, %cst_6 {dimension_numbers = #tpu.dot_dimension_numbers<[1], [0], [0], [1], [0, 0, 1, 1], [], []>} : vector<16x16xbf16>, vector<16x8xbf16>, vector<16x8xf32> -> vector<16x8xf32>
    %11 = arith.truncf %10 : vector<16x8xf32> to vector<16x8xbf16>
    %12 = tpu.concatenate %7, %9, %11 in 1 : vector<16x8xbf16>, vector<16x8xbf16>, vector<16x8xbf16> -> vector<16x24xbf16>
    %13 = tpu.concatenate %6, %12 in 0 : vector<16x24xbf16>, vector<16x24xbf16> -> vector<32x24xbf16>
    %c0_7 = arith.constant 0 : index
    %c0_8 = arith.constant 0 : index
    %14 = vector.load %arg3[%c0_7, %c0_8] : memref<24x128xbf16, #tpu.memory_space<vmem>>, vector<24x128xbf16>
    %cst_9 = arith.constant dense<0.000000e+00> : vector<32x128xf32>
    %15 = tpu.matmul %13, %14, %cst_9 {dimension_numbers = #tpu.dot_dimension_numbers<[1], [0], [0], [1], [0, 0, 1, 1], [], []>} : vector<32x24xbf16>, vector<24x128xbf16>, vector<32x128xf32> -> vector<32x128xf32>
    %cst_10 = arith.constant 0.000000e+00 : f32
    %16 = vector.broadcast %cst_10 : f32 to vector<32x128xf32>
    %17 = arith.maximumf %15, %16 : vector<32x128xf32>
    %c0_11 = arith.constant 0 : index
    %c0_12 = arith.constant 0 : index
    %18 = vector.load %arg4[%c0_11, %c0_12] : memref<32x128xf32, #tpu.memory_space<vmem>>, vector<32x128xf32>
    tpu.vector_store %arg4[%c0_11, %c0_12], %17 {strides = array<i32>} : memref<32x128xf32, #tpu.memory_space<vmem>>, vector<32x128xf32>,
    return
  }
  func.func @transform_0(%arg0: i32) -> (i32, i32) {
    %c0_i32 = arith.constant 0 : i32
    %c0_i32_0 = arith.constant 0 : i32
    return %arg0, %c0_i32 : i32, i32
  }
  func.func @transform_1(%arg0: i32) -> (i32, i32) {
    %c0_i32 = arith.constant 0 : i32
    %c0_i32_0 = arith.constant 0 : i32
    %c0_i32_1 = arith.constant 0 : i32
    return %c0_i32, %c0_i32_0 : i32, i32
  }
  func.func @transform_2(%arg0: i32) -> (i32, i32) {
    %c0_i32 = arith.constant 0 : i32
    %c0_i32_0 = arith.constant 0 : i32
    %c0_i32_1 = arith.constant 0 : i32
    return %c0_i32, %c0_i32_0 : i32, i32
  }
  func.func @transform_3(%arg0: i32) -> (i32, i32) {
    %c0_i32 = arith.constant 0 : i32
    %c0_i32_0 = arith.constant 0 : i32
    return %arg0, %c0_i32 : i32, i32
  }
}

</mosaic_0001>

<llo_original>
// kernel: tpu_custom_call.1
$region0: #{tpu_custom_call.1}
  #allocation0 [shape = 'u32[]', space=smem, size = 0x4, offset = 0x4, fixed_abs, tag = 'smem constant byte address 0x4 - core index']
  #allocation1 [shape = 'u32[144,128]{1,0:T(1,128)}', space=vmem, size = 0x12000, scoped, tag = 'internal scratch']
  %s0 = inlined_call_operand.vmem [shape: bf16[32,8], index: 0, kind: input, shape index: {}]
  %s1 = inlined_call_operand.vmem [shape: bf16[16,16], index: 1, kind: input, shape index: {}]
  %s2 = inlined_call_operand.vmem [shape: bf16[24,128], index: 2, kind: input, shape index: {}]
  %s3 = inlined_call_operand.hbm [shape: f32[32,128], index: 3, kind: output, shape index: {}]
  %s4 = sld [smem:[#allocation0]]
  $region22: #{tpu_custom_call.1} parent=0
    _
  %s6 = ssub.s32 1, %s4
  %s7 = scalar_select 0, %s6, %s4
  $region1: #{tpu_custom_call.1} parent=0
    #allocation2 [shape = 'u8[16384]{0}', space=vmem, size = 0x4000, scoped, tag = 'output window, operand 0, single buffered']
    #allocation3 [shape = 's32[1]{0}', space=sflag, size = 0x4, scoped, tag = 'scoped memory for tpu_custom_call.1']
    %8 = vsyncpa [#allocation3], 0
    // Predicated region
    $region2: #{tpu_custom_call.1} parent=1 // pred_check
      _
    $region3: #{tpu_custom_call.1} parent=1 // pred_check_branch
      %10 = sbr.rel (0) target = $region5
    $region4: #{tpu_custom_call.1} parent=1 // pred_region
      _
    $region5: #{tpu_custom_call.1} parent=1 // pred_fallthru
      _
    // Predicated region
    $region6: #{tpu_custom_call.1} parent=1 // pred_check
      _
    $region7: #{tpu_custom_call.1} parent=1 // pred_check_branch
      %12 = sbr.rel (0) target = $region9
    $region8: #{tpu_custom_call.1} parent=1 // pred_region
      _
    $region9: #{tpu_custom_call.1} parent=1 // pred_fallthru
      _
    // Predicated region
    $region10: #{tpu_custom_call.1} parent=1 // pred_check
      _
    $region11: #{tpu_custom_call.1} parent=1 // pred_check_branch
      %14 = sbr.rel (0) target = $region13
    $region12: #{tpu_custom_call.1} parent=1 // pred_region
      _
    $region13: #{tpu_custom_call.1} parent=1 // pred_fallthru
      _
    %v16 = vld [vmem:[%s1] sm:$0xf]
    %v17 = vld [vmem:[%s1 + $0x4] sm:$0xf]
    %v18 = vld [vmem:[%s0] sm:$0xf]
    %v19 = vld [vmem:[%s0 + $0x4] sm:$0xf]
    %v22 = vunpack.c.l.b16 %v16
    %v23 = vunpack.c.l.b16 %v17
    %v24 = vpack.c.b16 %v23, %v22
    %v27 = vunpack.c.l.b16 %v18
    %v28 = vunpack.c.l.b16 %v19
    %v29 = vpack.c.b16 %v28, %v27
    %vm31 = vcmask 130048
    %v33 = vsel %vm31, %v24, 0
    %35 = vmatprep.subr.bf16.mxu0 0
    %36 = vmatpush1.bf16.msra.mxu0 0
    %37 = vmatprep.subr.bf16.mxu0 0
    %38 = vmatpush1.bf16.msra.mxu0 0
    %39 = vmatprep.subr.bf16.mxu0 0
    %40 = vmatpush1.bf16.msra.mxu0 0
    %41 = vmatprep.subr.bf16.mxu0 0
    %42 = vmatpush1.bf16.msra.mxu0 0
    %43 = vmatprep.subr.bf16.mxu0 0
    %44 = vmatpush1.bf16.msra.mxu0 0
    %45 = vmatprep.subr.bf16.mxu0 0
    %46 = vmatpush1.bf16.msra.mxu0 0
    %47 = vmatprep.subr.bf16.mxu0 0
    %48 = vmatpush1.bf16.msra.mxu0 0
    %49 = vmatprep.subr.bf16.mxu0 0
    %50 = vmatpush1.bf16.msra.mxu0 %v29
    %51 = vmatprep.subr.bf16.mxu0 0
    %52 = vmatpush2.bf16.msra.mxu0 0
    %53 = vmatprep.subr.bf16.mxu0 0
    %54 = vmatpush2.bf16.msra.mxu0 0
    %55 = vmatprep.subr.bf16.mxu0 0
    %56 = vmatpush2.bf16.msra.mxu0 0
    %57 = vmatprep.subr.bf16.mxu0 0
    %58 = vmatpush2.bf16.msra.mxu0 0
    %59 = vmatprep.subr.bf16.mxu0 0
    %60 = vmatpush2.bf16.msra.mxu0 0
    %61 = vmatprep.subr.bf16.mxu0 0
    %62 = vmatpush2.bf16.msra.mxu0 0
    %63 = vmatprep.subr.bf16.mxu0 0
    %64 = vmatpush2.bf16.msra.mxu0 0
    %65 = vmatprep.subr.bf16.mxu0 0
    %66 = vmatpush2.bf16.msra.mxu0 0
    %67 = vmatprep.mubr.bf16.mxu0 0
    %68 = vmatmul.mubr.bf16.gmra.mxu0 %v33
    %v69 = vpop.f32.mrf.mxu0
    %v70 = vadd.f32 0.0, %v69
    %v71 = vpop.f32.mrf.mxu0
    %v72 = vpop.f32.mrf.mxu0
    %v73 = vadd.f32 0.0, %v72
    %v74 = vpop.f32.mrf.mxu0
    %75 = vdwg.mxu0
    %v76 = vpack.c.bf16 %v73, %v70
    %77 = vmatprep.subr.bf16.mxu0 0
    %78 = vmatpush1.bf16.msra.mxu0 0
    %79 = vmatprep.subr.bf16.mxu0 0
    %80 = vmatpush1.bf16.msra.mxu0 0
    %81 = vmatprep.subr.bf16.mxu0 0
    %82 = vmatpush1.bf16.msra.mxu0 0
    %83 = vmatprep.subr.bf16.mxu0 0
    %84 = vmatpush1.bf16.msra.mxu0 0
    %85 = vmatprep.subr.bf16.mxu0 0
    %86 = vmatpush1.bf16.msra.mxu0 0
    %87 = vmatprep.subr.bf16.mxu0 0
    %88 = vmatpush1.bf16.msra.mxu0 0
    %89 = vmatprep.subr.bf16.mxu0 0
    %90 = vmatpush1.bf16.msra.mxu0 0
    %91 = vmatprep.subr.bf16.mxu0 0
    %92 = vmatpush1.bf16.msra.mxu0 %v76
    %93 = vmatprep.subr.bf16.mxu0 0
    %94 = vmatpush2.bf16.msra.mxu0 0
    %95 = vmatprep.subr.bf16.mxu0 0
    %96 = vmatpush2.bf16.msra.mxu0 0
    %97 = vmatprep.subr.bf16.mxu0 0
    %98 = vmatpush2.bf16.msra.mxu0 0
    %99 = vmatprep.subr.bf16.mxu0 0
    %100 = vmatpush2.bf16.msra.mxu0 0
    %101 = vmatprep.subr.bf16.mxu0 0
    %102 = vmatpush2.bf16.msra.mxu0 0
    %103 = vmatprep.subr.bf16.mxu0 0
    %104 = vmatpush2.bf16.msra.mxu0 0
    %105 = vmatprep.subr.bf16.mxu0 0
    %106 = vmatpush2.bf16.msra.mxu0 0
    %107 = vmatprep.subr.bf16.mxu0 0
    %108 = vmatpush2.bf16.msra.mxu0 0
    %109 = vmatprep.mubr.bf16.mxu0 0
    %110 = vmatmul.mubr.bf16.gmra.mxu0 %v33
    %v111 = vpop.f32.mrf.mxu0
    %v112 = vadd.f32 0.0, %v111
    %v113 = vpop.f32.mrf.mxu0
    %v114 = vpop.f32.mrf.mxu0
    %v115 = vadd.f32 0.0, %v114
    %v116 = vpop.f32.mrf.mxu0
    %117 = vdwg.mxu0
    %v118 = vpack.c.bf16 %v115, %v112
    %120 = vrot.lane.b32.xlu0 %v76, 8
    %v121 = vpop.permute.xlu0 %120
    %123 = vrot.lane.b32.xlu0 %v118, 16
    %v124 = vpop.permute.xlu0 %123
    %vm125 = vcmask 64512
    %v128 = vsel %vm125, %v29, %v121
    %v130 = vsel %vm31, %v128, %v124
    %v131 = vld [vmem:[%s0 + $0x8] sm:$0xf]
    %v132 = vld [vmem:[%s0 + $0xc] sm:$0xf]
    %v135 = vunpack.c.l.b16 %v131
    %v136 = vunpack.c.l.b16 %v132
    %v137 = vpack.c.b16 %v136, %v135
    %139 = vmatprep.subr.bf16.mxu0 0
    %140 = vmatpush1.bf16.msra.mxu0 0
    %141 = vmatprep.subr.bf16.mxu0 0
    %142 = vmatpush1.bf16.msra.mxu0 0
    %143 = vmatprep.subr.bf16.mxu0 0
    %144 = vmatpush1.bf16.msra.mxu0 0
    %145 = vmatprep.subr.bf16.mxu0 0
    %146 = vmatpush1.bf16.msra.mxu0 0
    %147 = vmatprep.subr.bf16.mxu0 0
    %148 = vmatpush1.bf16.msra.mxu0 0
    %149 = vmatprep.subr.bf16.mxu0 0
    %150 = vmatpush1.bf16.msra.mxu0 0
    %151 = vmatprep.subr.bf16.mxu0 0
    %152 = vmatpush1.bf16.msra.mxu0 0
    %153 = vmatprep.subr.bf16.mxu0 0
    %154 = vmatpush1.bf16.msra.mxu0 %v137
    %155 = vmatprep.subr.bf16.mxu0 0
    %156 = vmatpush2.bf16.msra.mxu0 0
    %157 = vmatprep.subr.bf16.mxu0 0
    %158 = vmatpush2.bf16.msra.mxu0 0
    %159 = vmatprep.subr.bf16.mxu0 0
    %160 = vmatpush2.bf16.msra.mxu0 0
    %161 = vmatprep.subr.bf16.mxu0 0
    %162 = vmatpush2.bf16.msra.mxu0 0
    %163 = vmatprep.subr.bf16.mxu0 0
    %164 = vmatpush2.bf16.msra.mxu0 0
    %165 = vmatprep.subr.bf16.mxu0 0
    %166 = vmatpush2.bf16.msra.mxu0 0
    %167 = vmatprep.subr.bf16.mxu0 0
    %168 = vmatpush2.bf16.msra.mxu0 0
    %169 = vmatprep.subr.bf16.mxu0 0
    %170 = vmatpush2.bf16.msra.mxu0 0
    %171 = vmatprep.mubr.bf16.mxu0 0
    %172 = vmatmul.mubr.bf16.gmra.mxu0 %v33
    %v173 = vpop.f32.mrf.mxu0
    %v174 = vadd.f32 0.0, %v173
    %v175 = vpop.f32.mrf.mxu0
    %v176 = vpop.f32.mrf.mxu0
    %v177 = vadd.f32 0.0, %v176
    %v178 = vpop.f32.mrf.mxu0
    %179 = vdwg.mxu0
    %v180 = vpack.c.bf16 %v177, %v174
    %181 = vmatprep.subr.bf16.mxu0 0
    %182 = vmatpush1.bf16.msra.mxu0 0
    %183 = vmatprep.subr.bf16.mxu0 0
    %184 = vmatpush1.bf16.msra.mxu0 0
    %185 = vmatprep.subr.bf16.mxu0 0
    %186 = vmatpush1.bf16.msra.mxu0 0
    %187 = vmatprep.subr.bf16.mxu0 0
    %188 = vmatpush1.bf16.msra.mxu0 0
    %189 = vmatprep.subr.bf16.mxu0 0
    %190 = vmatpush1.bf16.msra.mxu0 0
    %191 = vmatprep.subr.bf16.mxu0 0
    %192 = vmatpush1.bf16.msra.mxu0 0
    %193 = vmatprep.subr.bf16.mxu0 0
    %194 = vmatpush1.bf16.msra.mxu0 0
    %195 = vmatprep.subr.bf16.mxu0 0
    %196 = vmatpush1.bf16.msra.mxu0 %v180
    %197 = vmatprep.subr.bf16.mxu0 0
    %198 = vmatpush2.bf16.msra.mxu0 0
    %199 = vmatprep.subr.bf16.mxu0 0
    %200 = vmatpush2.bf16.msra.mxu0 0
    %201 = vmatprep.subr.bf16.mxu0 0
    %202 = vmatpush2.bf16.msra.mxu0 0
    %203 = vmatprep.subr.bf16.mxu0 0
    %204 = vmatpush2.bf16.msra.mxu0 0
    %205 = vmatprep.subr.bf16.mxu0 0
    %206 = vmatpush2.bf16.msra.mxu0 0
    %207 = vmatprep.subr.bf16.mxu0 0
    %208 = vmatpush2.bf16.msra.mxu0 0
    %209 = vmatprep.subr.bf16.mxu0 0
    %210 = vmatpush2.bf16.msra.mxu0 0
    %211 = vmatprep.subr.bf16.mxu0 0
    %212 = vmatpush2.bf16.msra.mxu0 0
    %213 = vmatprep.mubr.bf16.mxu0 0
    %214 = vmatmul.mubr.bf16.gmra.mxu0 %v33
    %v215 = vpop.f32.mrf.mxu0
    %v216 = vadd.f32 0.0, %v215
    %v217 = vpop.f32.mrf.mxu0
    %v218 = vpop.f32.mrf.mxu0
    %v219 = vadd.f32 0.0, %v218
    %v220 = vpop.f32.mrf.mxu0
    %221 = vdwg.mxu0
    %v222 = vpack.c.bf16 %v219, %v216
    %224 = vrot.lane.b32.xlu0 %v180, 8
    %v225 = vpop.permute.xlu0 %224
    %227 = vrot.lane.b32.xlu0 %v222, 16
    %v228 = vpop.permute.xlu0 %227
    %v231 = vsel %vm125, %v137, %v225
    %v233 = vsel %vm31, %v231, %v228
    %v234 = vld [vmem:[%s2] sm:$0xf]
    %v235 = vld [vmem:[%s2 + $0x4] sm:$0xf]
    %v236 = vld [vmem:[%s2 + $0x8] sm:$0xf]
    %v240 = vunpack.c.l.b16 %v234
    %v241 = vunpack.c.l.b16 %v235
    %v242 = vunpack.c.l.b16 %v236
    %v243 = vpack.c.b16 %v241, %v240
    %v244 = vpack.c.b16 %v242, %v242
    %vm246 = vcmask 195584
    %v247 = vsel %vm246, %v130, 0
    %v249 = vsel %vm246, %v233, 0
    %vm251 = vcmask 1043456
    %v253 = vsel %vm251, %v244, 0
    %255 = vmatprep.subr.bf16.mxu0 0
    %256 = vmatpush1.bf16.msra.mxu0 0
    %257 = vmatprep.subr.bf16.mxu0 0
    %258 = vmatpush1.bf16.msra.mxu0 0
    %259 = vmatprep.subr.bf16.mxu0 0
    %260 = vmatpush1.bf16.msra.mxu0 0
    %261 = vmatprep.subr.bf16.mxu0 0
    %262 = vmatpush1.bf16.msra.mxu0 0
    %263 = vmatprep.subr.bf16.mxu0 0
    %264 = vmatpush1.bf16.msra.mxu0 0
    %265 = vmatprep.subr.bf16.mxu0 0
    %266 = vmatpush1.bf16.msra.mxu0 0
    %267 = vmatprep.subr.bf16.mxu0 0
    %268 = vmatpush1.bf16.msra.mxu0 %v253
    %269 = vmatprep.subr.bf16.mxu0 0
    %270 = vmatpush1.bf16.msra.mxu0 %v243
    %271 = vmatprep.subr.bf16.mxu0 0
    %272 = vmatpush2.bf16.msra.mxu0 0
    %273 = vmatprep.subr.bf16.mxu0 0
    %274 = vmatpush2.bf16.msra.mxu0 0
    %275 = vmatprep.subr.bf16.mxu0 0
    %276 = vmatpush2.bf16.msra.mxu0 0
    %277 = vmatprep.subr.bf16.mxu0 0
    %278 = vmatpush2.bf16.msra.mxu0 0
    %279 = vmatprep.subr.bf16.mxu0 0
    %280 = vmatpush2.bf16.msra.mxu0 0
    %281 = vmatprep.subr.bf16.mxu0 0
    %282 = vmatpush2.bf16.msra.mxu0 0
    %283 = vmatprep.subr.bf16.mxu0 0
    %284 = vmatpush2.bf16.msra.mxu0 0
    %285 = vmatprep.subr.bf16.mxu0 0
    %286 = vmatpush2.bf16.msra.mxu0 0
    %287 = vmatprep.mubr.bf16.mxu0 0
    %288 = vmatmul.mubr.bf16.gmra.mxu0 %v247
    %v289 = vpop.f32.mrf.mxu0
    %v290 = vadd.f32 0.0, %v289
    %v291 = vpop.f32.mrf.mxu0
    %v292 = vpop.f32.mrf.mxu0
    %v293 = vadd.f32 0.0, %v292
    %v294 = vpop.f32.mrf.mxu0
    %295 = vmatprep.mubr.bf16.mxu0 0
    %296 = vmatmul.mubr.bf16.gmra.mxu0 %v249
    %v297 = vpop.f32.mrf.mxu0
    %v298 = vadd.f32 0.0, %v297
    %v299 = vpop.f32.mrf.mxu0
    %v300 = vpop.f32.mrf.mxu0
    %v301 = vadd.f32 0.0, %v300
    %v302 = vpop.f32.mrf.mxu0
    %303 = vdwg.mxu0
    %v304 = vmax.f32 %v290, 0.0
    %v305 = vmax.f32 %v293, 0.0
    %v306 = vmax.f32 %v298, 0.0
    %v307 = vmax.f32 %v301, 0.0
    %308 = vst [vmem:[#allocation2] sm:$0xff] %v304
    %309 = vst [vmem:[#allocation2 + $0x8] sm:$0xff] %v305
    %310 = vst [vmem:[#allocation2 + $0x10] sm:$0xff] %v306
    %311 = vst [vmem:[#allocation2 + $0x18] sm:$0xff] %v307
    // Predicated region
    $region14: #{tpu_custom_call.1} parent=1 // pred_check
      _
    $region15: #{tpu_custom_call.1} parent=1 // pred_check_branch
      %313 = sbr.rel (0) target = $region17
    $region16: #{tpu_custom_call.1} parent=1 // pred_region
      %s315 = ssub.s32 512, 512
      %316 = vsyncadd [#allocation3], %s315
      %s317 = sshll.u32 [#allocation2], 4
      %s318 = int_to_ptr.vmem [resolvable:$true] %s317
      %323 = dma.vmem_to_hbm [thread:$0]  %s318, 512, %s3, [#allocation3], 128, 128, 8
    $region17: #{tpu_custom_call.1} parent=1 // pred_fallthru
      _
    // Predicated region
    $region18: #{tpu_custom_call.1} parent=1 // pred_check
      _
    $region19: #{tpu_custom_call.1} parent=1 // pred_check_branch
      %325 = sbr.rel (0) target = $region21
    $region20: #{tpu_custom_call.1} parent=1 // pred_region
      %326 = dma.done [#allocation3], 512
    $region21: #{tpu_custom_call.1} parent=1 // pred_fallthru
      _
    %327 = vsyncpa [#allocation3], 1

</llo_original>
